<compile_context>
chip_gen: v5e
topology: v5e:2x2
jax: 0.10.0
libtpu: 0.0.40
codegen_flags: <defaults>
</compile_context>

<pallas_src>
import jax
import jax.numpy as jnp
from jax.experimental import pallas as pl
from jax.experimental.pallas import tpu as pltpu

_LANES = 128
_SUBLANES = 8


def _distreg_kernel(s1_ref, blur_ref, out_ref):
    # s1_ref / blur_ref: (1, n, TR, 128) VMEM tiles; out_ref: (1, TR, 128).
    n = s1_ref.shape[1]
    inv_n = jnp.float32(1.0 / n)
    inv_nm1 = jnp.float32(1.0 / (n - 1))

    # Per-channel lane-dense 2-D tiles; cast to f32 in-kernel.
    s1_c = [s1_ref[0, j].astype(jnp.float32) for j in range(n)]
    bl_c = [blur_ref[0, j].astype(jnp.float32) for j in range(n)]

    # Hypothesis 0: v_j = s1_j - blur_j for all j.  Exact centered sums.
    d_c = [s1_c[j] - bl_c[j] for j in range(n)]
    S = d_c[0]
    for j in range(1, n):
        S = S + d_c[j]
    mean0 = S * inv_n
    r = d_c[0] - mean0
    C = r * r
    for j in range(1, n):
        r = d_c[j] - mean0
        C = C + r * r

    best_var = C * inv_nm1
    best_mean = mean0

    # Hypothesis i -> i+1 flips channel i from (s1 - blur) to (s1 + blur):
    #   C += 4*blur_i*(s1_i - (S_i + blur_i)/n)   (centered update, no Q-S^2/n)
    #   S += 2*blur_i
    # TODO(synk): for large n switch this unrolled loop to lax.fori_loop
    # (unroll=True) carrying (S, C, best_var, best_mean) to bound vreg live ranges.
    for i in range(n):
        b = bl_c[i]
        C = C + 4.0 * b * (s1_c[i] - (S + b) * inv_n)
        S = S + 2.0 * b
        var = C * inv_nm1
        mean = S * inv_n
        better = var < best_var  # strict < keeps first-occurrence argmin (torch)
        best_var = jnp.where(better, var, best_var)
        best_mean = jnp.where(better, mean, best_mean)

    out_ref[0] = best_mean.astype(out_ref.dtype)


def distregression_forward(s1, blur, *, max_tile_rows=512):
    bs, n, H, W = s1.shape
    assert n >= 2, "n == 1 divides by zero in the unbiased std (same as the reference)"
    P = H * W

    rows = -(-P // _LANES)                              # cdiv(P, 128)
    rows_aligned = -(-rows // _SUBLANES) * _SUBLANES    # multiple of 8 sublanes
    # Cap per-block input footprint (n * TR * 128 * 4B) at ~1 MiB so the
    # double-buffered pipeline stays well within v7x's 64 MiB VMEM and the
    # 16/32 MiB scoped defaults on v5e/v6e.
    tr_cap = max(_SUBLANES, ((1 << 20) // (n * _LANES * 4)) // _SUBLANES * _SUBLANES)
    tr = min(max_tile_rows, rows_aligned, tr_cap)
    rows_pad = -(-rows_aligned // tr) * tr
    P_pad = rows_pad * _LANES
    num_tiles = rows_pad // tr

    def prep(x):
        x = x.reshape(bs, n, P)
        if P_pad != P:
            x = jnp.pad(x, ((0, 0), (0, 0), (0, P_pad - P)))
        return x.reshape(bs, n, rows_pad, _LANES)

    s1_p = prep(s1)      # native dtype; cast happens inside the kernel
    blur_p = prep(blur)

    out = pl.pallas_call(
        _distreg_kernel,
        out_shape=jax.ShapeDtypeStruct((bs, rows_pad, _LANES), s1.dtype),
        grid_spec=pltpu.PrefetchScalarGridSpec(
            num_scalar_prefetch=0,
            grid=(bs, num_tiles),
            in_specs=[
                pl.BlockSpec((1, n, tr, _LANES), lambda b, t: (b, 0, t, 0)),
                pl.BlockSpec((1, n, tr, _LANES), lambda b, t: (b, 0, t, 0)),
            ],
            out_specs=pl.BlockSpec((1, tr, _LANES), lambda b, t: (b, t, 0)),
        ),
        compiler_params=pltpu.CompilerParams(
            dimension_semantics=("parallel", "parallel"),
        ),
    )(s1_p, blur_p)

    # Padded pixels (zeros) produce harmless zeros; slice them off.
    return out.reshape(bs, P_pad)[:, :P].reshape(bs, H, W)


def _reference_jax(s1, blur):
    """Pure-JAX transcription of the PyTorch forward (for validation)."""
    bs, n, H, W = s1.shape
    i_idx = jnp.arange(n + 1)[:, None]
    j_idx = jnp.arange(n)[None, :]
    sign = jnp.where(j_idx >= i_idx, -1.0, 1.0).astype(s1.dtype)     # (n+1, n)
    v = s1[:, None] + sign[None, :, :, None, None] * blur[:, None]   # (bs,n+1,n,H,W)
    stds = jnp.std(v, axis=2, ddof=1)                                # (bs, n+1, H, W)
    means = jnp.mean(v, axis=2)                                      # (bs, n+1, H, W)
    amin = jnp.argmin(stds, axis=1)                                  # (bs, H, W)
    sel = jnp.take_along_axis(means, amin[:, None], axis=1)[:, 0]
    return sel, means, stds


if __name__ == "__main__":
    bs, n, imgsize = 2, 3, 24
    key = jax.random.PRNGKey(0)
    k1, k2 = jax.random.split(key)
    s1 = jax.random.normal(k1, (bs, n, imgsize, imgsize), dtype=jnp.float32)
    blur = 0.1 * jax.random.normal(k2, (bs, n, imgsize, imgsize), dtype=jnp.float32)

    out = jax.block_until_ready(distregression_forward(s1, blur))
    assert out.shape == (bs, imgsize, imgsize)

    ref, means, stds = _reference_jax(s1, blur)
    strict_ok = jnp.abs(out - ref) <= 1e-4
    # Tolerate fp tie-breaks in the argmin: also accept the mean of any
    # hypothesis whose std is within a tiny tolerance of the per-pixel minimum.
    min_std = jnp.min(stds, axis=1, keepdims=True)
    near_min = stds <= min_std + 1e-4
    matches = jnp.abs(means - out[:, None]) <= 1e-4
    robust_ok = jnp.any(near_min & matches, axis=1)
    assert bool(jnp.all(strict_ok | robust_ok)), "mismatch vs reference"
    assert float(jnp.mean(strict_ok.astype(jnp.float32))) > 0.99, "too many diffs"

    print("KERNEL_OK")
</pallas_src>

<mosaic_0001>
module attributes {stable_mosaic.version = 11 : i64} {
  func.func @_distreg_kernel(%arg0: i32, %arg1: i32, %arg2: memref<1x3x8x128xf32, #tpu.memory_space<vmem>>, %arg3: memref<1x3x8x128xf32, #tpu.memory_space<vmem>>, %arg4: memref<1x8x128xf32, #tpu.memory_space<vmem>>) attributes {dimension_semantics = [#tpu.dimension_semantics<parallel>, #tpu.dimension_semantics<parallel>], iteration_bounds = array<i64: 2, 1>, scalar_prefetch = 0 : i64, scratch_operands = 0 : i64, tpu.core_type = #tpu.core_type<tc>, window_params = [{transform_indices = @transform_0, window_bounds = array<i64: 1, 3, 8, 128>}, {transform_indices = @transform_1, window_bounds = array<i64: 1, 3, 8, 128>}, {transform_indices = @transform_2, window_bounds = array<i64: 1, 8, 128>}]} {
    %c0 = arith.constant 0 : index
    %c0_0 = arith.constant 0 : index
    %c0_1 = arith.constant 0 : index
    %c0_2 = arith.constant 0 : index
    %0 = vector.load %arg2[%c0, %c0_0, %c0_1, %c0_2] : memref<1x3x8x128xf32, #tpu.memory_space<vmem>>, vector<1x1x8x128xf32>
    %1 = vector.shape_cast %0 : vector<1x1x8x128xf32> to vector<8x128xf32>
    %c0_3 = arith.constant 0 : index
    %c1 = arith.constant 1 : index
    %c0_4 = arith.constant 0 : index
    %c0_5 = arith.constant 0 : index
    %2 = vector.load %arg2[%c0_3, %c1, %c0_4, %c0_5] : memref<1x3x8x128xf32, #tpu.memory_space<vmem>>, vector<1x1x8x128xf32>
    %3 = vector.shape_cast %2 : vector<1x1x8x128xf32> to vector<8x128xf32>
    %c0_6 = arith.constant 0 : index
    %c2 = arith.constant 2 : index
    %c0_7 = arith.constant 0 : index
    %c0_8 = arith.constant 0 : index
    %4 = vector.load %arg2[%c0_6, %c2, %c0_7, %c0_8] : memref<1x3x8x128xf32, #tpu.memory_space<vmem>>, vector<1x1x8x128xf32>
    %5 = vector.shape_cast %4 : vector<1x1x8x128xf32> to vector<8x128xf32>
    %c0_9 = arith.constant 0 : index
    %c0_10 = arith.constant 0 : index
    %c0_11 = arith.constant 0 : index
    %c0_12 = arith.constant 0 : index
    %6 = vector.load %arg3[%c0_9, %c0_10, %c0_11, %c0_12] : memref<1x3x8x128xf32, #tpu.memory_space<vmem>>, vector<1x1x8x128xf32>
    %7 = vector.shape_cast %6 : vector<1x1x8x128xf32> to vector<8x128xf32>
    %c0_13 = arith.constant 0 : index
    %c1_14 = arith.constant 1 : index
    %c0_15 = arith.constant 0 : index
    %c0_16 = arith.constant 0 : index
    %8 = vector.load %arg3[%c0_13, %c1_14, %c0_15, %c0_16] : memref<1x3x8x128xf32, #tpu.memory_space<vmem>>, vector<1x1x8x128xf32>
    %9 = vector.shape_cast %8 : vector<1x1x8x128xf32> to vector<8x128xf32>
    %c0_17 = arith.constant 0 : index
    %c2_18 = arith.constant 2 : index
    %c0_19 = arith.constant 0 : index
    %c0_20 = arith.constant 0 : index
    %10 = vector.load %arg3[%c0_17, %c2_18, %c0_19, %c0_20] : memref<1x3x8x128xf32, #tpu.memory_space<vmem>>, vector<1x1x8x128xf32>
    %11 = vector.shape_cast %10 : vector<1x1x8x128xf32> to vector<8x128xf32>
    %12 = arith.subf %1, %7 : vector<8x128xf32>
    %13 = arith.subf %3, %9 : vector<8x128xf32>
    %14 = arith.subf %5, %11 : vector<8x128xf32>
    %15 = arith.addf %12, %13 : vector<8x128xf32>
    %16 = arith.addf %15, %14 : vector<8x128xf32>
    %cst = arith.constant 0.333333343 : f32
    %17 = vector.broadcast %cst : f32 to vector<8x128xf32>
    %18 = arith.mulf %16, %17 : vector<8x128xf32>
    %19 = arith.subf %12, %18 : vector<8x128xf32>
    %20 = arith.mulf %19, %19 : vector<8x128xf32>
    %21 = arith.subf %13, %18 : vector<8x128xf32>
    %22 = arith.mulf %21, %21 : vector<8x128xf32>
    %23 = arith.addf %20, %22 : vector<8x128xf32>
    %24 = arith.subf %14, %18 : vector<8x128xf32>
    %25 = arith.mulf %24, %24 : vector<8x128xf32>
    %26 = arith.addf %23, %25 : vector<8x128xf32>
    %cst_21 = arith.constant 5.000000e-01 : f32
    %27 = vector.broadcast %cst_21 : f32 to vector<8x128xf32>
    %28 = arith.mulf %26, %27 : vector<8x128xf32>
    %cst_22 = arith.constant 4.000000e+00 : f32
    %29 = vector.broadcast %cst_22 : f32 to vector<8x128xf32>
    %30 = arith.mulf %29, %7 : vector<8x128xf32>
    %31 = arith.addf %16, %7 : vector<8x128xf32>
    %cst_23 = arith.constant 0.333333343 : f32
    %32 = vector.broadcast %cst_23 : f32 to vector<8x128xf32>
    %33 = arith.mulf %31, %32 : vector<8x128xf32>
    %34 = arith.subf %1, %33 : vector<8x128xf32>
    %35 = arith.mulf %30, %34 : vector<8x128xf32>
    %36 = arith.addf %26, %35 : vector<8x128xf32>
    %cst_24 = arith.constant 2.000000e+00 : f32
    %37 = vector.broadcast %cst_24 : f32 to vector<8x128xf32>
    %38 = arith.mulf %37, %7 : vector<8x128xf32>
    %39 = arith.addf %16, %38 : vector<8x128xf32>
    %cst_25 = arith.constant 5.000000e-01 : f32
    %40 = vector.broadcast %cst_25 : f32 to vector<8x128xf32>
    %41 = arith.mulf %36, %40 : vector<8x128xf32>
    %cst_26 = arith.constant 0.333333343 : f32
    %42 = vector.broadcast %cst_26 : f32 to vector<8x128xf32>
    %43 = arith.mulf %39, %42 : vector<8x128xf32>
    %44 = arith.cmpf olt, %41, %28 : vector<8x128xf32>
    %45 = arith.select %44, %41, %28 : vector<8x128xi1>, vector<8x128xf32>
    %46 = arith.select %44, %43, %18 : vector<8x128xi1>, vector<8x128xf32>
    %cst_27 = arith.constant 4.000000e+00 : f32
    %47 = vector.broadcast %cst_27 : f32 to vector<8x128xf32>
    %48 = arith.mulf %47, %9 : vector<8x128xf32>
    %49 = arith.addf %39, %9 : vector<8x128xf32>
    %cst_28 = arith.constant 0.333333343 : f32
    %50 = vector.broadcast %cst_28 : f32 to vector<8x128xf32>
    %51 = arith.mulf %49, %50 : vector<8x128xf32>
    %52 = arith.subf %3, %51 : vector<8x128xf32>
    %53 = arith.mulf %48, %52 : vector<8x128xf32>
    %54 = arith.addf %36, %53 : vector<8x128xf32>
    %cst_29 = arith.constant 2.000000e+00 : f32
    %55 = vector.broadcast %cst_29 : f32 to vector<8x128xf32>
    %56 = arith.mulf %55, %9 : vector<8x128xf32>
    %57 = arith.addf %39, %56 : vector<8x128xf32>
    %cst_30 = arith.constant 5.000000e-01 : f32
    %58 = vector.broadcast %cst_30 : f32 to vector<8x128xf32>
    %59 = arith.mulf %54, %58 : vector<8x128xf32>
    %cst_31 = arith.constant 0.333333343 : f32
    %60 = vector.broadcast %cst_31 : f32 to vector<8x128xf32>
    %61 = arith.mulf %57, %60 : vector<8x128xf32>
    %62 = arith.cmpf olt, %59, %45 : vector<8x128xf32>
    %63 = arith.select %62, %59, %45 : vector<8x128xi1>, vector<8x128xf32>
    %64 = arith.select %62, %61, %46 : vector<8x128xi1>, vector<8x128xf32>
    %cst_32 = arith.constant 4.000000e+00 : f32
    %65 = vector.broadcast %cst_32 : f32 to vector<8x128xf32>
    %66 = arith.mulf %65, %11 : vector<8x128xf32>
    %67 = arith.addf %57, %11 : vector<8x128xf32>
    %cst_33 = arith.constant 0.333333343 : f32
    %68 = vector.broadcast %cst_33 : f32 to vector<8x128xf32>
    %69 = arith.mulf %67, %68 : vector<8x128xf32>
    %70 = arith.subf %5, %69 : vector<8x128xf32>
    %71 = arith.mulf %66, %70 : vector<8x128xf32>
    %72 = arith.addf %54, %71 : vector<8x128xf32>
    %cst_34 = arith.constant 2.000000e+00 : f32
    %73 = vector.broadcast %cst_34 : f32 to vector<8x128xf32>
    %74 = arith.mulf %73, %11 : vector<8x128xf32>
    %75 = arith.addf %57, %74 : vector<8x128xf32>
    %cst_35 = arith.constant 5.000000e-01 : f32
    %76 = vector.broadcast %cst_35 : f32 to vector<8x128xf32>
    %77 = arith.mulf %72, %76 : vector<8x128xf32>
    %cst_36 = arith.constant 0.333333343 : f32
    %78 = vector.broadcast %cst_36 : f32 to vector<8x128xf32>
    %79 = arith.mulf %75, %78 : vector<8x128xf32>
    %80 = arith.cmpf olt, %77, %63 : vector<8x128xf32>
    %81 = arith.select %80, %79, %64 : vector<8x128xi1>, vector<8x128xf32>
    %c0_37 = arith.constant 0 : index
    %c0_38 = arith.constant 0 : index
    %c0_39 = arith.constant 0 : index
    %82 = vector.load %arg4[%c0_37, %c0_38, %c0_39] : memref<1x8x128xf32, #tpu.memory_space<vmem>>, vector<1x8x128xf32>
    %83 = vector.shape_cast %82 : vector<1x8x128xf32> to vector<8x128xf32>
    %84 = vector.shape_cast %81 : vector<8x128xf32> to vector<1x8x128xf32>
    tpu.vector_store %arg4[%c0_37, %c0_38, %c0_39], %84 {strides = array<i32>} : memref<1x8x128xf32, #tpu.memory_space<vmem>>, vector<1x8x128xf32>,
    return
  }
  func.func @transform_0(%arg0: i32, %arg1: i32) -> (i32, i32, i32, i32) {
    %c0_i32 = arith.constant 0 : i32
    %c0_i32_0 = arith.constant 0 : i32
    %c0_i32_1 = arith.constant 0 : i32
    return %arg0, %c0_i32, %arg1, %c0_i32_0 : i32, i32, i32, i32
  }
  func.func @transform_1(%arg0: i32, %arg1: i32) -> (i32, i32, i32, i32) {
    %c0_i32 = arith.constant 0 : i32
    %c0_i32_0 = arith.constant 0 : i32
    %c0_i32_1 = arith.constant 0 : i32
    return %arg0, %c0_i32, %arg1, %c0_i32_0 : i32, i32, i32, i32
  }
  func.func @transform_2(%arg0: i32, %arg1: i32) -> (i32, i32, i32) {
    %c0_i32 = arith.constant 0 : i32
    %c0_i32_0 = arith.constant 0 : i32
    return %arg0, %arg1, %c0_i32 : i32, i32, i32
  }
}

</mosaic_0001>

<llo_original>
// kernel: tpu_custom_call.1
$region0: #{tpu_custom_call.1}
  #allocation0 [shape = 'u32[]', space=smem, size = 0x4, offset = 0x4, fixed_abs, tag = 'smem constant byte address 0x4 - core index']
  #allocation1 [shape = 'u32[72,128]{1,0:T(1,128)}', space=vmem, size = 0x9000, scoped, tag = 'internal scratch']
  %s0 = inlined_call_operand.hbm [shape: f32[2,3,8,128], index: 0, kind: input, shape index: {}]
  %s1 = inlined_call_operand.hbm [shape: f32[2,3,8,128], index: 1, kind: input, shape index: {}]
  %s2 = inlined_call_operand.hbm [shape: f32[2,8,128], index: 2, kind: output, shape index: {}]
  %s3 = sld [smem:[#allocation0]]
  $region49: #{tpu_custom_call.1} parent=0
    _
  %s5 = ssub.s32 1, %s3
  %s6 = scalar_select 0, %s5, %s3
  $region1: #{tpu_custom_call.1} parent=0
    #allocation2 [shape = 'u8[24576]{0}', space=vmem, size = 0x6000, scoped, tag = 'input window, operand 0']
    #allocation3 [shape = 's32[2]{0}', space=sflag, size = 0x8, scoped, tag = 'scoped memory for tpu_custom_call.1']
    #allocation4 [shape = 's32[2]{0}', space=sflag, size = 0x8, scoped, tag = 'scoped memory for tpu_custom_call.1']
    #allocation5 [shape = 'u8[24576]{0}', space=vmem, size = 0x6000, scoped, tag = 'input window, operand 1']
    #allocation6 [shape = 's32[2]{0}', space=sflag, size = 0x8, scoped, tag = 'scoped memory for tpu_custom_call.1']
    #allocation7 [shape = 'u8[8192]{0}', space=vmem, size = 0x2000, scoped, tag = 'output window, operand 0']
    %7 = vsyncpa [#allocation3], 0
    %s8 = scalar_lea.sflag [#allocation3], 1
    %9 = vsyncpa %s8, 0
    %10 = vsyncpa [#allocation6], 0
    %s11 = scalar_lea.sflag [#allocation6], 1
    %12 = vsyncpa %s11, 0
    %13 = vsyncpa [#allocation4], 0
    %s14 = scalar_lea.sflag [#allocation4], 1
    %15 = vsyncpa %s14, 0
    loop: start=0, step=1, limit=4
    $region2: #{tpu_custom_call.1} parent=1 // loop_pre_header
      _
    $region3: #{tpu_custom_call.1} parent=1 // loop_header
      %s17 = sphi 0, %s21
      %p18 = scmp.ge.s32.totalorder %s17, 4
      %s24 = sphi 0, %s36
      %s25 = sphi 0, %s32
      %s26 = sphi 0, %s24
      %s27 = sphi 0, %s25
      %s28 = sphi 0, %s26
      %s29 = sphi 0, %s27
      %s41 = sphi 0, %s43
      %s44 = sphi 0, %s41
      %s45 = sphi 0, %s44
      %s61 = sphi 0, %s45
      %s69 = sphi 0, %s71
      %s72 = sphi 0, %s69
      %s73 = sphi 0, %s72
      %s89 = sphi 0, %s73
      %s97 = sphi 0, %s99
      %s100 = sphi 0, %s97
      %s101 = sphi 0, %s100
      %s117 = sphi 0, %s101
    $region4: #{tpu_custom_call.1} parent=1 // loop_header_branch
      %20 = sbr.rel (%p18) target = $region8
    $region5: #{tpu_custom_call.1} parent=1 // loop_body
      %s22 = ssub.s32 %s17, 1
      %s23 = ssub.s32 %s17, 2
      %s30 = sadd.s32 1, %s25
      %p31 = scmp.ge.s32.totalorder %s30, 1
      %s32 = scalar_select %p31, 0, %s30
      %s33 = sadd.s32 1, %s24
      %s34 = scalar_select %p31, %s33, %s24
      %p35 = scmp.ge.s32.totalorder %s34, 2
      %s36 = scalar_select %p35, 0, %s34
      %s37 = ssub.s32 %s24, %s36
      %s38 = ssub.s32 %s25, %s32
      %s39 = sor.u32 %s37, %s38
      %p40 = scmp.eq.s32.totalorder %s39, 0
      %s42 = sadd.s32 %s41, 1
      %s43 = scalar_select %p40, %s41, %s42
      %p46 = pneg %p40
      %p47 = scmp.eq.s32.totalorder %s17, 1
      %p48 = por %p46, %p47
      %p49 = scmp.ne.s32.totalorder %s41, %s44
      %p50 = scmp.eq.s32.totalorder %s17, 0
      %p51 = por %p49, %p50
      %p52 = scmp.ne.s32.totalorder %s41, %s44
      %p53 = scmp.eq.s32.totalorder %s22, 1
      %p54 = por %p52, %p53
      %p55 = scmp.ne.s32.totalorder %s44, %s45
      %p56 = scmp.eq.s32.totalorder %s22, 0
      %p57 = por %p55, %p56
      %p58 = scmp.ne.s32.totalorder %s44, %s45
      %p59 = scmp.eq.s32.totalorder %s23, 1
      %p60 = por %p58, %p59
      %p62 = scmp.ne.s32.totalorder %s45, %s61
      %p63 = scmp.eq.s32.totalorder %s23, 0
      %p64 = por %p62, %p63
      %s65 = ssub.s32 %s24, %s36
      %s66 = ssub.s32 %s25, %s32
      %s67 = sor.u32 %s65, %s66
      %p68 = scmp.eq.s32.totalorder %s67, 0
      %s70 = sadd.s32 %s69, 1
      %s71 = scalar_select %p68, %s69, %s70
      %p74 = pneg %p68
      %p75 = scmp.eq.s32.totalorder %s17, 1
      %p76 = por %p74, %p75
      %p77 = scmp.ne.s32.totalorder %s69, %s72
      %p78 = scmp.eq.s32.totalorder %s17, 0
      %p79 = por %p77, %p78
      %p80 = scmp.ne.s32.totalorder %s69, %s72
      %p81 = scmp.eq.s32.totalorder %s22, 1
      %p82 = por %p80, %p81
      %p83 = scmp.ne.s32.totalorder %s72, %s73
      %p84 = scmp.eq.s32.totalorder %s22, 0
      %p85 = por %p83, %p84
      %p86 = scmp.ne.s32.totalorder %s72, %s73
      %p87 = scmp.eq.s32.totalorder %s23, 1
      %p88 = por %p86, %p87
      %p90 = scmp.ne.s32.totalorder %s73, %s89
      %p91 = scmp.eq.s32.totalorder %s23, 0
      %p92 = por %p90, %p91
      %s93 = ssub.s32 %s24, %s36
      %s94 = ssub.s32 %s25, %s32
      %s95 = sor.u32 %s93, %s94
      %p96 = scmp.eq.s32.totalorder %s95, 0
      %s98 = sadd.s32 %s97, 1
      %s99 = scalar_select %p96, %s97, %s98
      %p102 = pneg %p96
      %p103 = scmp.eq.s32.totalorder %s17, 1
      %p104 = por %p102, %p103
      %p105 = scmp.ne.s32.totalorder %s97, %s100
      %p106 = scmp.eq.s32.totalorder %s17, 0
      %p107 = por %p105, %p106
      %p108 = scmp.ne.s32.totalorder %s97, %s100
      %p109 = scmp.eq.s32.totalorder %s22, 1
      %p110 = por %p108, %p109
      %p111 = scmp.ne.s32.totalorder %s100, %s101
      %p112 = scmp.eq.s32.totalorder %s22, 0
      %p113 = por %p111, %p112
      %p114 = scmp.ne.s32.totalorder %s100, %s101
      %p115 = scmp.eq.s32.totalorder %s23, 1
      %p116 = por %p114, %p115
      %p118 = scmp.ne.s32.totalorder %s101, %s117
      %p119 = scmp.eq.s32.totalorder %s23, 0
      %p120 = por %p118, %p119
      %p121 = scmp.le.s32.totalorder 1, %s17
      %p122 = scmp.lt.s32.totalorder %s17, 3
      %p123 = pnand %p121, %p122
      %p124 = pneg %p123
      // Predicated region
      $region9: #{tpu_custom_call.1} parent=5 // pred_check
        _
      $region10: #{tpu_custom_call.1} parent=5 // pred_check_branch
        %126 = sbr.rel (%p123) target = $region12
      $region11: #{tpu_custom_call.1} parent=5 // pred_region
        %s127 = ssub.s32 %s17, 1
      $region12: #{tpu_custom_call.1} parent=5 // pred_fallthru
        _
      %p128 = scmp.lt.s32.totalorder %s17, 2
      // Predicated region
      $region13: #{tpu_custom_call.1} parent=5 // pred_check
        %p129 = pneg %p128
      $region14: #{tpu_custom_call.1} parent=5 // pred_check_branch
        %131 = sbr.rel (%p129) target = $region16
      $region15: #{tpu_custom_call.1} parent=5 // pred_region
        // Predicated region
        $region17: #{tpu_custom_call.1} parent=15 // pred_check
          %p132 = pneg %p51
        $region18: #{tpu_custom_call.1} parent=15 // pred_check_branch
          %134 = sbr.rel (%p132) target = $region20
        $region19: #{tpu_custom_call.1} parent=15 // pred_region
          %s135 = sand.u32 %s41, 1
          %s136 = scalar_lea.sflag [#allocation3], %s135
          %s137 = sand.u32 %s41, 1
          %s138 = smul.addr %s137, 24
          %s139 = scalar_lea.vmem [#allocation2], %s138
          %141 = vsyncadd %s136, 0
          %s142 = smul.addr %s24, 3
          %s143 = sadd.s32 %s25, %s142
          %s144 = smul.addr %s143, 8
          %s145 = scalar_lea.hbm %s0, %s144
          %s146 = sshll.u32 %s145, 4
          %s147 = int_to_ptr.hbm [resolvable:$true] %s146
          %s148 = sshll.u32 %s139, 4
          %s149 = int_to_ptr.vmem [resolvable:$true] %s148
          %154 = dma.hbm_to_vmem [thread:$0]  %s147, 384, %s149, %s136, 128, 128, 8
        $region20: #{tpu_custom_call.1} parent=15 // pred_fallthru
          _
        // Predicated region
        $region21: #{tpu_custom_call.1} parent=15 // pred_check
          %p155 = pneg %p79
        $region22: #{tpu_custom_call.1} parent=15 // pred_check_branch
          %157 = sbr.rel (%p155) target = $region24
        $region23: #{tpu_custom_call.1} parent=15 // pred_region
          %s158 = sand.u32 %s69, 1
          %s159 = scalar_lea.sflag [#allocation6], %s158
          %s160 = sand.u32 %s69, 1
          %s161 = smul.addr %s160, 24
          %s162 = scalar_lea.vmem [#allocation5], %s161
          %164 = vsyncadd %s159, 0
          %s165 = smul.addr %s24, 3
          %s166 = sadd.s32 %s25, %s165
          %s167 = smul.addr %s166, 8
          %s168 = scalar_lea.hbm %s1, %s167
          %s169 = sshll.u32 %s168, 4
          %s170 = int_to_ptr.hbm [resolvable:$true] %s169
          %s171 = sshll.u32 %s162, 4
          %s172 = int_to_ptr.vmem [resolvable:$true] %s171
          %177 = dma.hbm_to_vmem [thread:$0]  %s170, 384, %s172, %s159, 128, 128, 8
        $region24: #{tpu_custom_call.1} parent=15 // pred_fallthru
          _
      $region16: #{tpu_custom_call.1} parent=5 // pred_fallthru
        _
      %p178 = scmp.le.s32.totalorder 1, %s17
      %p179 = scmp.lt.s32.totalorder %s17, 3
      %p180 = pnand %p178, %p179
      %p181 = pneg %p180
      // Predicated region
      $region25: #{tpu_custom_call.1} parent=5 // pred_check
        _
      $region26: #{tpu_custom_call.1} parent=5 // pred_check_branch
        %183 = sbr.rel (%p180) target = $region28
      $region27: #{tpu_custom_call.1} parent=5 // pred_region
        %s184 = ssub.s32 %s17, 1
        %s185 = sand.u32 %s44, 1
        %s186 = scalar_lea.sflag [#allocation3], %s185
        %s187 = sand.u32 %s44, 1
        %s188 = smul.addr %s187, 24
        %s189 = scalar_lea.vmem [#allocation2], %s188
        // Predicated region
        $region29: #{tpu_custom_call.1} parent=27 // pred_check
          %p190 = pneg %p57
        $region30: #{tpu_custom_call.1} parent=27 // pred_check_branch
          %192 = sbr.rel (%p190) target = $region32
        $region31: #{tpu_custom_call.1} parent=27 // pred_region
          %194 = dma.done %s186, 384
        $region32: #{tpu_custom_call.1} parent=27 // pred_fallthru
          _
        %s195 = sand.u32 %s72, 1
        %s196 = scalar_lea.sflag [#allocation6], %s195
        %s197 = sand.u32 %s72, 1
        %s198 = smul.addr %s197, 24
        %s199 = scalar_lea.vmem [#allocation5], %s198
        // Predicated region
        $region33: #{tpu_custom_call.1} parent=27 // pred_check
          %p200 = pneg %p85
        $region34: #{tpu_custom_call.1} parent=27 // pred_check_branch
          %202 = sbr.rel (%p200) target = $region36
        $region35: #{tpu_custom_call.1} parent=27 // pred_region
          %204 = dma.done %s196, 384
        $region36: #{tpu_custom_call.1} parent=27 // pred_fallthru
          _
        %s205 = sand.u32 %s44, 1
        %s206 = scalar_lea.sflag [#allocation3], %s205
        %s207 = sand.u32 %s44, 1
        %s208 = smul.addr %s207, 24
        %s209 = scalar_lea.vmem [#allocation2], %s208
        %p210 = pneg %p57
        %p211 = pneg %p54
        %s212 = sand.u32 %s72, 1
        %s213 = scalar_lea.sflag [#allocation6], %s212
        %s214 = sand.u32 %s72, 1
        %s215 = smul.addr %s214, 24
        %s216 = scalar_lea.vmem [#allocation5], %s215
        %p217 = pneg %p85
        %p218 = pneg %p82
        %p219 = pneg %p113
        %p220 = pneg %p110
        %s221 = sand.u32 %s100, 1
        %s222 = scalar_lea.sflag [#allocation4], %s221
        %s223 = sand.u32 %s100, 1
        %s224 = smul.addr %s223, 8
        %s225 = scalar_lea.vmem [#allocation7], %s224
        %v226 = vld [vmem:[%s189] sm:$0xff]
        %s227 = scalar_lea.vmem %s189, 8 [#allocation2]
        %v228 = vld [vmem:[%s227] sm:$0xff]
        %s229 = scalar_lea.vmem %s189, 16 [#allocation2]
        %v230 = vld [vmem:[%s229] sm:$0xff]
        %v231 = vld [vmem:[%s199] sm:$0xff]
        %s232 = scalar_lea.vmem %s199, 8 [#allocation5]
        %v233 = vld [vmem:[%s232] sm:$0xff]
        %s234 = scalar_lea.vmem %s199, 16 [#allocation5]
        %v235 = vld [vmem:[%s234] sm:$0xff]
        %v236 = vsub.f32 %v226, %v231
        %v237 = vsub.f32 %v228, %v233
        %v238 = vsub.f32 %v230, %v235
        %v239 = vadd.f32 %v236, %v237
        %v240 = vadd.f32 %v239, %v238
        %v241 = vmul.f32 %v240, 0.33333334
        %v242 = vsub.f32 %v236, %v241
        %v243 = vmul.f32 %v242, %v242
        %v244 = vsub.f32 %v237, %v241
        %v245 = vmul.f32 %v244, %v244
        %v246 = vadd.f32 %v243, %v245
        %v247 = vsub.f32 %v238, %v241
        %v248 = vmul.f32 %v247, %v247
        %v249 = vadd.f32 %v246, %v248
        %v250 = vmul.f32 %v249, 0.5
        %v251 = vmul.f32 %v231, 4.0
        %v252 = vadd.f32 %v240, %v231
        %v253 = vmul.f32 %v252, 0.33333334
        %v254 = vsub.f32 %v226, %v253
        %v255 = vmul.f32 %v251, %v254
        %v256 = vadd.f32 %v249, %v255
        %v257 = vmul.f32 %v231, 2.0
        %v258 = vadd.f32 %v240, %v257
        %v259 = vmul.f32 %v256, 0.5
        %v260 = vmul.f32 %v258, 0.33333334
        %vm261 = vcmp.lt.f32.partialorder %v259, %v250
        %v262 = vsel %vm261, %v259, %v250
        %v263 = vsel %vm261, %v260, %v241
        %v264 = vmul.f32 %v233, 4.0
        %v265 = vadd.f32 %v258, %v233
        %v266 = vmul.f32 %v265, 0.33333334
        %v267 = vsub.f32 %v228, %v266
        %v268 = vmul.f32 %v264, %v267
        %v269 = vadd.f32 %v256, %v268
        %v270 = vmul.f32 %v233, 2.0
        %v271 = vadd.f32 %v258, %v270
        %v272 = vmul.f32 %v269, 0.5
        %v273 = vmul.f32 %v271, 0.33333334
        %vm274 = vcmp.lt.f32.partialorder %v272, %v262
        %v275 = vsel %vm274, %v272, %v262
        %v276 = vsel %vm274, %v273, %v263
        %v277 = vmul.f32 %v235, 4.0
        %v278 = vadd.f32 %v271, %v235
        %v279 = vmul.f32 %v278, 0.33333334
        %v280 = vsub.f32 %v230, %v279
        %v281 = vmul.f32 %v277, %v280
        %v282 = vadd.f32 %v269, %v281
        %v283 = vmul.f32 %v235, 2.0
        %v284 = vadd.f32 %v271, %v283
        %v285 = vmul.f32 %v282, 0.5
        %v286 = vmul.f32 %v284, 0.33333334
        %vm287 = vcmp.lt.f32.partialorder %v285, %v275
        %v288 = vsel %vm287, %v286, %v276
        %289 = vst [vmem:[%s225] sm:$0xff] %v288
        %s290 = sand.u32 %s100, 1
        %s291 = scalar_lea.sflag [#allocation4], %s290
        %s292 = sand.u32 %s100, 1
        %s293 = smul.addr %s292, 8
        %s294 = scalar_lea.vmem [#allocation7], %s293
        // Predicated region
        $region37: #{tpu_custom_call.1} parent=27 // pred_check
          %p295 = pneg %p110
        $region38: #{tpu_custom_call.1} parent=27 // pred_check_branch
          %297 = sbr.rel (%p295) target = $region40
        $region39: #{tpu_custom_call.1} parent=27 // pred_region
          %299 = vsyncadd %s291, 0
          %s300 = sadd.s32 %s27, %s26
          %s301 = smul.addr %s300, 8
          %s302 = scalar_lea.hbm %s2, %s301
          %s304 = sshll.u32 %s294, 4
          %s305 = int_to_ptr.vmem [resolvable:$true] %s304
          %s306 = sshll.u32 %s302, 4
          %s307 = int_to_ptr.hbm [resolvable:$true] %s306
          %309 = dma.vmem_to_hbm [thread:$0]  %s305, 128, %s307, %s291
        $region40: #{tpu_custom_call.1} parent=27 // pred_fallthru
          _
      $region28: #{tpu_custom_call.1} parent=5 // pred_fallthru
        _
      %p310 = scmp.le.s32.totalorder 2, %s17
      // Predicated region
      $region41: #{tpu_custom_call.1} parent=5 // pred_check
        %p311 = pneg %p310
      $region42: #{tpu_custom_call.1} parent=5 // pred_check_branch
        %313 = sbr.rel (%p311) target = $region44
      $region43: #{tpu_custom_call.1} parent=5 // pred_region
        %s314 = ssub.s32 %s17, 2
        // Predicated region
        $region45: #{tpu_custom_call.1} parent=43 // pred_check
          %p315 = pneg %p116
        $region46: #{tpu_custom_call.1} parent=43 // pred_check_branch
          %317 = sbr.rel (%p315) target = $region48
        $region47: #{tpu_custom_call.1} parent=43 // pred_region
          %s318 = sand.u32 %s101, 1
          %s319 = scalar_lea.sflag [#allocation4], %s318
          %s320 = sand.u32 %s101, 1
          %s321 = smul.addr %s320, 8
          %s322 = scalar_lea.vmem [#allocation7], %s321
          %324 = dma.done %s319, 128
        $region48: #{tpu_custom_call.1} parent=43 // pred_fallthru
          _
      $region44: #{tpu_custom_call.1} parent=5 // pred_fallthru
        _
    $region6: #{tpu_custom_call.1} parent=1 // loop_footer
      %s21 = sadd.s32 1, %s17
    $region7: #{tpu_custom_call.1} parent=1 // loop_footer_branch
      %16 = sbr.rel target = $region3
    $region8: #{tpu_custom_call.1} parent=1 // loop_exit
      _
    %325 = vsyncpa [#allocation3], 1
    %s326 = scalar_lea.sflag [#allocation3], 1
    %327 = vsyncpa %s326, 1
    %328 = vsyncpa [#allocation6], 1
    %s329 = scalar_lea.sflag [#allocation6], 1
    %330 = vsyncpa %s329, 1
    %331 = vsyncpa [#allocation4], 1
    %s332 = scalar_lea.sflag [#allocation4], 1
    %333 = vsyncpa %s332, 1

</llo_original>
